<compile_context>
chip_gen: v7x
topology: tpu7x:2x2x1
jax: 0.10.0
libtpu: 0.0.40
codegen_flags: <defaults>
</compile_context>

<pallas_src>
import jax
import jax.numpy as jnp
from jax.experimental import pallas as pl
from jax.experimental.pallas import tpu as pltpu

# --- physical constants (match PvtolDynamics.__init__ defaults) -------------
LENGTH = 0.25
MASS = 4.0
INERTIA = 0.0475
GRAVITY = 9.8
DIST = 0.25
DT = 0.05

# Precomputed reciprocals: constant multiplies ride VALU slots instead of the
# divide/EUP path, which is already busy with sin/cos.
INV_MASS = 1.0 / MASS
DIST_OVER_INERTIA = DIST / INERTIA

LANE = 128
SUBLANE = 8
MAX_TILE_R = 512  # 512 rows x 128 lanes = 65536 batch elems / block (~7 MiB dbl-buffered)


def _round_up(x, m):
    return (x + m - 1) // m * m


def _pvtol_kernel(state_ref, u_ref, out_ref):
    # state_ref: (6, tile_r, 128), u_ref: (2, tile_r, 128), out_ref: (6, tile_r, 128)
    # Each feature is a dense (tile_r, 128) slab: every vreg is 1024-dense, all
    # stores are full-vreg unmasked vst, sin/cos EUP pushes are minimal.
    x       = state_ref[0]
    y       = state_ref[1]
    theta   = state_ref[2]
    x_d     = state_ref[3]
    y_d     = state_ref[4]
    theta_d = state_ref[5]
    u_1     = u_ref[0]
    u_2     = u_ref[1]

    sin_theta = jnp.sin(theta)
    cos_theta = jnp.cos(theta)

    x_change = x_d * cos_theta - y_d * sin_theta
    y_change = x_d * sin_theta + y_d * cos_theta
    # theta_change == theta_d
    x_d_change = y_d * theta_d - GRAVITY * sin_theta
    y_d_change = -x_d * theta_d - GRAVITY * cos_theta + (u_1 + u_2) * INV_MASS
    theta_d_change = (u_1 - u_2) * DIST_OVER_INERTIA

    out_ref[0] = x + DT * x_change
    out_ref[1] = y + DT * y_change
    out_ref[2] = theta + DT * theta_d
    out_ref[3] = x_d + DT * x_d_change
    out_ref[4] = y_d + DT * y_d_change
    out_ref[5] = theta_d + DT * theta_d_change


def _pick_tile_r(R):
    """Rows (of 128 lanes) per grid block.

    Block second-to-last dim must be a multiple of 8 or equal the full row
    extent R.  Cap at MAX_TILE_R, and prefer >=2 grid blocks whenever there is
    enough work so the "parallel" axis can split across v7x's two TensorCores.
    """
    if R <= 2 * SUBLANE:
        return R                                    # tiny: single full-extent block
    tile_r = _round_up(pl.cdiv(R, 2), SUBLANE)      # ~half the rows -> >= 2 blocks
    return min(tile_r, MAX_TILE_R)


def pvtol_dynamics_soa(state_soa, u_soa):
    """Preferred entry point: persistent SoA layout, no transposes.

    state_soa: (6, B) float32, u_soa: (2, B) float32 -> next state (6, B).
    """
    nx, B = state_soa.shape
    assert nx == 6 and u_soa.shape == (2, B)
    dtype = state_soa.dtype

    # Pad batch only to a multiple of 128 lanes (waste < 0.5% for large B).
    padded_b = _round_up(B, LANE)
    if padded_b != B:
        pad = padded_b - B
        state_soa = jnp.pad(state_soa, ((0, 0), (0, pad)))
        u_soa = jnp.pad(u_soa, ((0, 0), (0, pad)))

    # Pure metadata reshape: batch axis -> (rows, 128 lanes).
    R = padded_b // LANE
    state3 = state_soa.reshape(6, R, LANE)
    u3 = u_soa.reshape(2, R, LANE)

    tile_r = _pick_tile_r(R)
    grid = (pl.cdiv(R, tile_r),)

    out3 = pl.pallas_call(
        _pvtol_kernel,
        out_shape=jax.ShapeDtypeStruct((6, R, LANE), dtype),
        grid=grid,
        in_specs=[
            pl.BlockSpec((6, tile_r, LANE), lambda i: (0, i, 0)),
            pl.BlockSpec((2, tile_r, LANE), lambda i: (0, i, 0)),
        ],
        out_specs=pl.BlockSpec((6, tile_r, LANE), lambda i: (0, i, 0)),
        compiler_params=pltpu.CompilerParams(
            dimension_semantics=("parallel",),
            vmem_limit_bytes=32 * 1024 * 1024,
        ),
    )(state3, u3)

    out = out3.reshape(6, padded_b)
    if padded_b != B:
        out = out[:, :B]
    return out


def pvtol_dynamics(state, u):
    """PyTorch-API-compatible wrapper: state (B, 6), u (B, 2) -> (B, 6).

    Note: this pays two skinny-transpose copy passes around the kernel; for
    best end-to-end performance keep the state in SoA form across calls and
    use `pvtol_dynamics_soa` directly.
    """
    return pvtol_dynamics_soa(state.T, u.T).T


def _reference(state, u):
    """Pure-JAX reference mirroring the PyTorch forward."""
    x, y, theta, x_d, y_d, theta_d = [state[:, i:i + 1] for i in range(6)]
    u_1, u_2 = u[:, 0:1], u[:, 1:2]
    s, c = jnp.sin(theta), jnp.cos(theta)
    x_change = x_d * c - y_d * s
    y_change = x_d * s + y_d * c
    x_d_change = y_d * theta_d - GRAVITY * s
    y_d_change = -x_d * theta_d - GRAVITY * c + (u_1 + u_2) / MASS
    theta_d_change = (u_1 - u_2) * DIST / INERTIA
    return jnp.concatenate(
        [x + DT * x_change, y + DT * y_change, theta + DT * theta_d,
         x_d + DT * x_d_change, y_d + DT * y_d_change,
         theta_d + DT * theta_d_change], axis=-1)


if __name__ == "__main__":
    key = jax.random.PRNGKey(0)

    # Small, PyTorch-API-shaped check (B, 6) / (B, 2).
    k1, k2 = jax.random.split(key)
    B = 8
    state = jax.random.normal(k1, (B, 6), dtype=jnp.float32)
    u = (MASS * GRAVITY / 2.0) + 0.5 * jax.random.normal(k2, (B, 2), dtype=jnp.float32)

    out = pvtol_dynamics(state, u)
    jax.block_until_ready(out)
    ref = _reference(state, u)
    assert out.shape == (B, 6)
    assert jnp.allclose(out, ref, atol=1e-5, rtol=1e-5), "mismatch vs reference (B=8)"

    # Exercise the padding / multi-row path with a non-multiple-of-128 batch
    # via the preferred SoA entry point.
    k3, k4 = jax.random.split(k2)
    B2 = 300
    state2 = jax.random.normal(k3, (B2, 6), dtype=jnp.float32)
    u2 = (MASS * GRAVITY / 2.0) + 0.5 * jax.random.normal(k4, (B2, 2), dtype=jnp.float32)
    out2_soa = pvtol_dynamics_soa(state2.T, u2.T)
    jax.block_until_ready(out2_soa)
    ref2 = _reference(state2, u2)
    assert out2_soa.shape == (6, B2)
    assert jnp.allclose(out2_soa.T, ref2, atol=1e-5, rtol=1e-5), "mismatch vs reference (B=300)"

    print("KERNEL_OK")
</pallas_src>

<mosaic_0001>
module attributes {stable_mosaic.version = 11 : i64} {
  func.func @_pvtol_kernel(%arg0: i32, %arg1: memref<6x1x128xf32, #tpu.memory_space<vmem>>, %arg2: memref<2x1x128xf32, #tpu.memory_space<vmem>>, %arg3: memref<6x1x128xf32, #tpu.memory_space<vmem>>) attributes {dimension_semantics = [#tpu.dimension_semantics<parallel>], iteration_bounds = array<i64: 1>, scalar_prefetch = 0 : i64, scratch_operands = 0 : i64, tpu.core_type = #tpu.core_type<tc>, window_params = [{transform_indices = @transform_0, window_bounds = array<i64: 6, 1, 128>}, {transform_indices = @transform_1, window_bounds = array<i64: 2, 1, 128>}, {transform_indices = @transform_2, window_bounds = array<i64: 6, 1, 128>}]} {
    %c0 = arith.constant 0 : index
    %c0_0 = arith.constant 0 : index
    %c0_1 = arith.constant 0 : index
    %0 = vector.load %arg1[%c0, %c0_0, %c0_1] : memref<6x1x128xf32, #tpu.memory_space<vmem>>, vector<1x1x128xf32>
    %1 = vector.shape_cast %0 : vector<1x1x128xf32> to vector<1x128xf32>
    %c1 = arith.constant 1 : index
    %c0_2 = arith.constant 0 : index
    %c0_3 = arith.constant 0 : index
    %2 = vector.load %arg1[%c1, %c0_2, %c0_3] : memref<6x1x128xf32, #tpu.memory_space<vmem>>, vector<1x1x128xf32>
    %3 = vector.shape_cast %2 : vector<1x1x128xf32> to vector<1x128xf32>
    %c2 = arith.constant 2 : index
    %c0_4 = arith.constant 0 : index
    %c0_5 = arith.constant 0 : index
    %4 = vector.load %arg1[%c2, %c0_4, %c0_5] : memref<6x1x128xf32, #tpu.memory_space<vmem>>, vector<1x1x128xf32>
    %5 = vector.shape_cast %4 : vector<1x1x128xf32> to vector<1x128xf32>
    %c3 = arith.constant 3 : index
    %c0_6 = arith.constant 0 : index
    %c0_7 = arith.constant 0 : index
    %6 = vector.load %arg1[%c3, %c0_6, %c0_7] : memref<6x1x128xf32, #tpu.memory_space<vmem>>, vector<1x1x128xf32>
    %7 = vector.shape_cast %6 : vector<1x1x128xf32> to vector<1x128xf32>
    %c4 = arith.constant 4 : index
    %c0_8 = arith.constant 0 : index
    %c0_9 = arith.constant 0 : index
    %8 = vector.load %arg1[%c4, %c0_8, %c0_9] : memref<6x1x128xf32, #tpu.memory_space<vmem>>, vector<1x1x128xf32>
    %9 = vector.shape_cast %8 : vector<1x1x128xf32> to vector<1x128xf32>
    %c5 = arith.constant 5 : index
    %c0_10 = arith.constant 0 : index
    %c0_11 = arith.constant 0 : index
    %10 = vector.load %arg1[%c5, %c0_10, %c0_11] : memref<6x1x128xf32, #tpu.memory_space<vmem>>, vector<1x1x128xf32>
    %11 = vector.shape_cast %10 : vector<1x1x128xf32> to vector<1x128xf32>
    %c0_12 = arith.constant 0 : index
    %c0_13 = arith.constant 0 : index
    %c0_14 = arith.constant 0 : index
    %12 = vector.load %arg2[%c0_12, %c0_13, %c0_14] : memref<2x1x128xf32, #tpu.memory_space<vmem>>, vector<1x1x128xf32>
    %13 = vector.shape_cast %12 : vector<1x1x128xf32> to vector<1x128xf32>
    %c1_15 = arith.constant 1 : index
    %c0_16 = arith.constant 0 : index
    %c0_17 = arith.constant 0 : index
    %14 = vector.load %arg2[%c1_15, %c0_16, %c0_17] : memref<2x1x128xf32, #tpu.memory_space<vmem>>, vector<1x1x128xf32>
    %15 = vector.shape_cast %14 : vector<1x1x128xf32> to vector<1x128xf32>
    %16 = math.sin %5 : vector<1x128xf32>
    %17 = math.cos %5 : vector<1x128xf32>
    %18 = arith.mulf %7, %17 : vector<1x128xf32>
    %19 = arith.mulf %9, %16 : vector<1x128xf32>
    %20 = arith.subf %18, %19 : vector<1x128xf32>
    %21 = arith.mulf %7, %16 : vector<1x128xf32>
    %22 = arith.mulf %9, %17 : vector<1x128xf32>
    %23 = arith.addf %21, %22 : vector<1x128xf32>
    %24 = arith.mulf %9, %11 : vector<1x128xf32>
    %cst = arith.constant 9.800000e+00 : f32
    %25 = vector.broadcast %cst : f32 to vector<1x128xf32>
    %26 = arith.mulf %25, %16 : vector<1x128xf32>
    %27 = arith.subf %24, %26 : vector<1x128xf32>
    %cst_18 = arith.constant 0.000000e+00 : f32
    %28 = vector.broadcast %cst_18 : f32 to vector<1x128xf32>
    %29 = arith.subf %28, %7 : vector<1x128xf32>
    %30 = arith.mulf %29, %11 : vector<1x128xf32>
    %cst_19 = arith.constant 9.800000e+00 : f32
    %31 = vector.broadcast %cst_19 : f32 to vector<1x128xf32>
    %32 = arith.mulf %31, %17 : vector<1x128xf32>
    %33 = arith.subf %30, %32 : vector<1x128xf32>
    %34 = arith.addf %13, %15 : vector<1x128xf32>
    %cst_20 = arith.constant 2.500000e-01 : f32
    %35 = vector.broadcast %cst_20 : f32 to vector<1x128xf32>
    %36 = arith.mulf %34, %35 : vector<1x128xf32>
    %37 = arith.addf %33, %36 : vector<1x128xf32>
    %38 = arith.subf %13, %15 : vector<1x128xf32>
    %cst_21 = arith.constant 5.26315784 : f32
    %39 = vector.broadcast %cst_21 : f32 to vector<1x128xf32>
    %40 = arith.mulf %38, %39 : vector<1x128xf32>
    %cst_22 = arith.constant 5.000000e-02 : f32
    %41 = vector.broadcast %cst_22 : f32 to vector<1x128xf32>
    %42 = arith.mulf %41, %20 : vector<1x128xf32>
    %43 = arith.addf %1, %42 : vector<1x128xf32>
    %c0_23 = arith.constant 0 : index
    %c0_24 = arith.constant 0 : index
    %c0_25 = arith.constant 0 : index
    %44 = vector.load %arg3[%c0_23, %c0_24, %c0_25] : memref<6x1x128xf32, #tpu.memory_space<vmem>>, vector<1x1x128xf32>
    %45 = vector.shape_cast %44 : vector<1x1x128xf32> to vector<1x128xf32>
    %46 = vector.shape_cast %43 : vector<1x128xf32> to vector<1x1x128xf32>
    tpu.vector_store %arg3[%c0_23, %c0_24, %c0_25], %46 {strides = array<i32>} : memref<6x1x128xf32, #tpu.memory_space<vmem>>, vector<1x1x128xf32>,
    %cst_26 = arith.constant 5.000000e-02 : f32
    %47 = vector.broadcast %cst_26 : f32 to vector<1x128xf32>
    %48 = arith.mulf %47, %23 : vector<1x128xf32>
    %49 = arith.addf %3, %48 : vector<1x128xf32>
    %c1_27 = arith.constant 1 : index
    %c0_28 = arith.constant 0 : index
    %c0_29 = arith.constant 0 : index
    %50 = vector.load %arg3[%c1_27, %c0_28, %c0_29] : memref<6x1x128xf32, #tpu.memory_space<vmem>>, vector<1x1x128xf32>
    %51 = vector.shape_cast %50 : vector<1x1x128xf32> to vector<1x128xf32>
    %52 = vector.shape_cast %49 : vector<1x128xf32> to vector<1x1x128xf32>
    tpu.vector_store %arg3[%c1_27, %c0_28, %c0_29], %52 {strides = array<i32>} : memref<6x1x128xf32, #tpu.memory_space<vmem>>, vector<1x1x128xf32>,
    %cst_30 = arith.constant 5.000000e-02 : f32
    %53 = vector.broadcast %cst_30 : f32 to vector<1x128xf32>
    %54 = arith.mulf %53, %11 : vector<1x128xf32>
    %55 = arith.addf %5, %54 : vector<1x128xf32>
    %c2_31 = arith.constant 2 : index
    %c0_32 = arith.constant 0 : index
    %c0_33 = arith.constant 0 : index
    %56 = vector.load %arg3[%c2_31, %c0_32, %c0_33] : memref<6x1x128xf32, #tpu.memory_space<vmem>>, vector<1x1x128xf32>
    %57 = vector.shape_cast %56 : vector<1x1x128xf32> to vector<1x128xf32>
    %58 = vector.shape_cast %55 : vector<1x128xf32> to vector<1x1x128xf32>
    tpu.vector_store %arg3[%c2_31, %c0_32, %c0_33], %58 {strides = array<i32>} : memref<6x1x128xf32, #tpu.memory_space<vmem>>, vector<1x1x128xf32>,
    %cst_34 = arith.constant 5.000000e-02 : f32
    %59 = vector.broadcast %cst_34 : f32 to vector<1x128xf32>
    %60 = arith.mulf %59, %27 : vector<1x128xf32>
    %61 = arith.addf %7, %60 : vector<1x128xf32>
    %c3_35 = arith.constant 3 : index
    %c0_36 = arith.constant 0 : index
    %c0_37 = arith.constant 0 : index
    %62 = vector.load %arg3[%c3_35, %c0_36, %c0_37] : memref<6x1x128xf32, #tpu.memory_space<vmem>>, vector<1x1x128xf32>
    %63 = vector.shape_cast %62 : vector<1x1x128xf32> to vector<1x128xf32>
    %64 = vector.shape_cast %61 : vector<1x128xf32> to vector<1x1x128xf32>
    tpu.vector_store %arg3[%c3_35, %c0_36, %c0_37], %64 {strides = array<i32>} : memref<6x1x128xf32, #tpu.memory_space<vmem>>, vector<1x1x128xf32>,
    %cst_38 = arith.constant 5.000000e-02 : f32
    %65 = vector.broadcast %cst_38 : f32 to vector<1x128xf32>
    %66 = arith.mulf %65, %37 : vector<1x128xf32>
    %67 = arith.addf %9, %66 : vector<1x128xf32>
    %c4_39 = arith.constant 4 : index
    %c0_40 = arith.constant 0 : index
    %c0_41 = arith.constant 0 : index
    %68 = vector.load %arg3[%c4_39, %c0_40, %c0_41] : memref<6x1x128xf32, #tpu.memory_space<vmem>>, vector<1x1x128xf32>
    %69 = vector.shape_cast %68 : vector<1x1x128xf32> to vector<1x128xf32>
    %70 = vector.shape_cast %67 : vector<1x128xf32> to vector<1x1x128xf32>
    tpu.vector_store %arg3[%c4_39, %c0_40, %c0_41], %70 {strides = array<i32>} : memref<6x1x128xf32, #tpu.memory_space<vmem>>, vector<1x1x128xf32>,
    %cst_42 = arith.constant 5.000000e-02 : f32
    %71 = vector.broadcast %cst_42 : f32 to vector<1x128xf32>
    %72 = arith.mulf %71, %40 : vector<1x128xf32>
    %73 = arith.addf %11, %72 : vector<1x128xf32>
    %c5_43 = arith.constant 5 : index
    %c0_44 = arith.constant 0 : index
    %c0_45 = arith.constant 0 : index
    %74 = vector.load %arg3[%c5_43, %c0_44, %c0_45] : memref<6x1x128xf32, #tpu.memory_space<vmem>>, vector<1x1x128xf32>
    %75 = vector.shape_cast %74 : vector<1x1x128xf32> to vector<1x128xf32>
    %76 = vector.shape_cast %73 : vector<1x128xf32> to vector<1x1x128xf32>
    tpu.vector_store %arg3[%c5_43, %c0_44, %c0_45], %76 {strides = array<i32>} : memref<6x1x128xf32, #tpu.memory_space<vmem>>, vector<1x1x128xf32>,
    return
  }
  func.func @transform_0(%arg0: i32) -> (i32, i32, i32) {
    %c0_i32 = arith.constant 0 : i32
    %c0_i32_0 = arith.constant 0 : i32
    %c0_i32_1 = arith.constant 0 : i32
    return %c0_i32, %arg0, %c0_i32_0 : i32, i32, i32
  }
  func.func @transform_1(%arg0: i32) -> (i32, i32, i32) {
    %c0_i32 = arith.constant 0 : i32
    %c0_i32_0 = arith.constant 0 : i32
    %c0_i32_1 = arith.constant 0 : i32
    return %c0_i32, %arg0, %c0_i32_0 : i32, i32, i32
  }
  func.func @transform_2(%arg0: i32) -> (i32, i32, i32) {
    %c0_i32 = arith.constant 0 : i32
    %c0_i32_0 = arith.constant 0 : i32
    %c0_i32_1 = arith.constant 0 : i32
    return %c0_i32, %arg0, %c0_i32_0 : i32, i32, i32
  }
}

</mosaic_0001>

<llo_original>
// kernel: tpu_custom_call.1
$region0: #{tpu_custom_call.1}
  #allocation0 [shape = 'u32[]', space=smem, size = 0x4, offset = 0x4, fixed_abs, tag = 'smem constant byte address 0x4 - core index']
  #allocation1 [shape = 'u32[144,128]{1,0:T(1,128)}', space=vmem, size = 0x12000, scoped, tag = 'internal scratch']
  %s0 = inlined_call_operand.hbm [shape: f32[6,1,128], index: 0, kind: input, shape index: {}]
  %s1 = inlined_call_operand.vmem [shape: f32[2,1,128], index: 1, kind: input, shape index: {}]
  %s2 = inlined_call_operand.hbm [shape: f32[6,1,128], index: 2, kind: output, shape index: {}]
  %s3 = sld [smem:[#allocation0]]
  $region22: #{tpu_custom_call.1} parent=0
    _
  %s5 = ssub.s32 1, %s3
  %s6 = scalar_select 0, %s5, %s3
  $region1: #{tpu_custom_call.1} parent=0
    #allocation2 [shape = 'u8[3072]{0}', space=vmem, size = 0xc00, scoped, tag = 'input window, operand 0, single buffered']
    #allocation3 [shape = 's32[1]{0}', space=sflag, size = 0x4, scoped, tag = 'scoped memory for tpu_custom_call.1']
    #allocation4 [shape = 's32[1]{0}', space=sflag, size = 0x4, scoped, tag = 'scoped memory for tpu_custom_call.1']
    #allocation5 [shape = 'u8[3072]{0}', space=vmem, size = 0xc00, scoped, tag = 'output window, operand 0, single buffered']
    %7 = vsyncpa [#allocation3], 0
    %8 = vsyncpa [#allocation4], 0
    // Predicated region
    $region2: #{tpu_custom_call.1} parent=1 // pred_check
      _
    $region3: #{tpu_custom_call.1} parent=1 // pred_check_branch
      %10 = sbr.rel (0) target = $region5
    $region4: #{tpu_custom_call.1} parent=1 // pred_region
      %s12 = ssub.s32 96, 96
      %13 = vsyncadd [#allocation3], %s12
      %s14 = sshll.u32 [#allocation2], 4
      %s15 = int_to_ptr.vmem [resolvable:$true] %s14
      %20 = dma.hbm_to_vmem [thread:$0]  %s0, 96, %s15, [#allocation3], 16, 16, 1
    $region5: #{tpu_custom_call.1} parent=1 // pred_fallthru
      _
    // Predicated region
    $region6: #{tpu_custom_call.1} parent=1 // pred_check
      _
    $region7: #{tpu_custom_call.1} parent=1 // pred_check_branch
      %22 = sbr.rel (0) target = $region9
    $region8: #{tpu_custom_call.1} parent=1 // pred_region
      _
    $region9: #{tpu_custom_call.1} parent=1 // pred_fallthru
      _
    // Predicated region
    $region10: #{tpu_custom_call.1} parent=1 // pred_check
      _
    $region11: #{tpu_custom_call.1} parent=1 // pred_check_branch
      %24 = sbr.rel (0) target = $region13
    $region12: #{tpu_custom_call.1} parent=1 // pred_region
      %25 = dma.done [#allocation3], 96
    $region13: #{tpu_custom_call.1} parent=1 // pred_fallthru
      _
    %v26 = vld [vmem:[#allocation2] sm:$0x1]
    %s27 = scalar_lea.vmem [#allocation2], 1
    %v28 = vld [vmem:[%s27] sm:$0x1]
    %s29 = scalar_lea.vmem [#allocation2], 2
    %v30 = vld [vmem:[%s29] sm:$0x1]
    %s31 = scalar_lea.vmem [#allocation2], 3
    %v32 = vld [vmem:[%s31] sm:$0x1]
    %s33 = scalar_lea.vmem [#allocation2], 4
    %v34 = vld [vmem:[%s33] sm:$0x1]
    %s35 = scalar_lea.vmem [#allocation2], 5
    %v36 = vld [vmem:[%s35] sm:$0x1]
    %v37 = vld [vmem:[%s1] sm:$0x1]
    %s38 = scalar_lea.vmem %s1, 1
    %v39 = vld [vmem:[%s38] sm:$0x1]
    %v40 = vand.u32 2147483647, %v30
    %vm41 = vcmp.le.f32.partialorder %v40, 0.7853982
    %vm42 = vcmp.lt.s32.totalorder %v30, 0
    %v43 = vand.u32 %v30, 2139095040
    %v44 = vshrl.u32 %v43, 23
    %v45 = vsub.s32 %v44, 127
    %v46 = vand.u32 2147483647, %v30
    %v47 = vand.u32 %v46, 8388607
    %v48 = vor.u32 %v47, 8388608
    %v49 = vsub.s32 0, %v48
    %v50 = vadd.s32 %v45, 1
    %vm51 = vcmp.gt.s32.totalorder %v50, 0
    %v52 = vsel %vm51, %v50, 0
    %v53 = vshrl.u32 %v52, 5
    %v54 = vand.u32 %v52, 31
    %v55 = vsub.s32 32, %v54
    %v56 = vshrl.u32 683565275, %v55
    %v57 = vshll.u32 683565275, %v54
    %v58 = vshrl.u32 2475754826, %v55
    %v59 = vor.u32 %v57, %v58
    %v60 = vshll.u32 2475754826, %v54
    %v61 = vshrl.u32 2131351028, %v55
    %v62 = vor.u32 %v60, %v61
    %v63 = vshll.u32 2131351028, %v54
    %v64 = vshrl.u32 2102212464, %v55
    %v65 = vor.u32 %v63, %v64
    %v66 = vshll.u32 2102212464, %v54
    %v67 = vshrl.u32 920167782, %v55
    %v68 = vor.u32 %v66, %v67
    %v69 = vshll.u32 920167782, %v54
    %v70 = vshrl.u32 1326507024, %v55
    %v71 = vor.u32 %v69, %v70
    %vm72 = vcmp.lt.s32.totalorder %v53, 1
    %vm73 = vcmp.lt.s32.totalorder %v53, 2
    %vm74 = vcmp.lt.s32.totalorder %v53, 3
    %vm75 = vcmp.lt.s32.totalorder %v53, 4
    %v76 = vsel %vm72, %v56, %v59
    %v77 = vsel %vm75, %v65, 2102212464
    %v78 = vsel %vm74, %v62, %v77
    %v79 = vsel %vm73, %v76, %v78
    %v80 = vsel %vm72, %v59, %v62
    %v81 = vsel %vm75, %v68, 920167782
    %v82 = vsel %vm74, %v65, %v81
    %v83 = vsel %vm73, %v80, %v82
    %v84 = vsel %vm72, %v62, %v65
    %v85 = vsel %vm75, %v71, 1326507024
    %v86 = vsel %vm74, %v68, %v85
    %v87 = vsel %vm73, %v84, %v86
    %v88 = vshll.u32 %v48, 8
    %v89 = vmul.u32.u64.compose %v88, %v87
    %v90 = vextract.low.u32 %v89
    %v91 = vextract.high.u32 %v89
    %v92 = vmul.u32.u64.compose %v88, %v83
    %v93 = vextract.low.u32 %v92
    %v94 = vextract.high.u32 %v92
    %v95 = vmul.u32 %v88, %v79
    %v96 = vadd.s32 %v91, %v93
    %vm97 = vc.u32 %v91, %v93
    %v98 = vadd.s32 %v94, 1
    %v99 = vsel %vm97, %v98, %v94
    %v100 = vadd.s32 %v95, %v99
    %v101 = vadd.s32 %v100, 536870912
    %v102 = vshrl.u32 %v101, 30
    %v103 = vshll.u32 %v102, 30
    %v104 = vsub.s32 %v100, %v103
    %vm105 = vcmp.lt.s32.totalorder %v104, 0
    %v106 = vsub.s32 0, %v104
    %v107 = vsel %vm105, %v106, %v104
    %v108 = vclz %v107
    %v109 = vsub.s32 %v108, 2
    %vm110 = vcmp.gt.s32.totalorder 0, %v109
    %v111 = vsel %vm110, 0, %v109
    %v112 = vsub.s32 32, %v111
    %v113 = vshll.u32 %v104, %v111
    %v114 = vshrl.u32 %v96, %v112
    %v115 = vor.u32 %v113, %v114
    %v116 = vsub.s32 4294967266, %v111
    %v117 = vadd.s32 %v116, 127
    %v118 = vshll.u32 %v117, 23
    %v119 = vor.u32 4788187, %v118
    %v120 = vand.u32 2147483647, %v119
    %v122 = vcvt.s32.f32 %v115
    %v123 = vmul.f32 %v122, %v120
    %v124 = vxor.u32 %v123, 2147483648
    %v125 = vsel %vm42, %v124, %v123
    %v126 = vsub.s32 4, %v102
    %v127 = vsel %vm42, %v126, %v102
    %v128 = vsel %vm41, %v30, %v125
    %v129 = vsel %vm41, 0, %v127
    %v130 = vcosq.f32.pop %v128
    %v131 = vsinq.f32.pop %v128
    %vm132 = vweird.f32 %v30
    %v133 = vadd.s32 %v129, 3
    %v134 = vand.u32 %v133, 3
    %vm135 = vcmp.lt.s32.totalorder %v134, 2
    %vm136 = vcmp.eq.s32.totalorder %v134, 0
    %v137 = vxor.u32 %v131, 2147483648
    %v138 = vsel %vm136, %v130, %v137
    %vm139 = vcmp.eq.s32.totalorder %v134, 2
    %v140 = vxor.u32 %v130, 2147483648
    %v141 = vsel %vm139, %v140, %v131
    %v142 = vsel %vm135, %v138, %v141
    %v143 = vsel %vm132, nan, %v142
    %v144 = vand.u32 2147483647, %v30
    %vm145 = vcmp.le.f32.partialorder %v144, 0.7853982
    %vm146 = vcmp.lt.s32.totalorder %v30, 0
    %v147 = vand.u32 %v30, 2139095040
    %v148 = vshrl.u32 %v147, 23
    %v149 = vsub.s32 %v148, 127
    %v150 = vand.u32 2147483647, %v30
    %v151 = vand.u32 %v150, 8388607
    %v152 = vor.u32 %v151, 8388608
    %v153 = vsub.s32 0, %v152
    %v154 = vadd.s32 %v149, 1
    %vm155 = vcmp.gt.s32.totalorder %v154, 0
    %v156 = vsel %vm155, %v154, 0
    %v157 = vshrl.u32 %v156, 5
    %v158 = vand.u32 %v156, 31
    %v159 = vsub.s32 32, %v158
    %v160 = vshrl.u32 683565275, %v159
    %v161 = vshll.u32 683565275, %v158
    %v162 = vshrl.u32 2475754826, %v159
    %v163 = vor.u32 %v161, %v162
    %v164 = vshll.u32 2475754826, %v158
    %v165 = vshrl.u32 2131351028, %v159
    %v166 = vor.u32 %v164, %v165
    %v167 = vshll.u32 2131351028, %v158
    %v168 = vshrl.u32 2102212464, %v159
    %v169 = vor.u32 %v167, %v168
    %v170 = vshll.u32 2102212464, %v158
    %v171 = vshrl.u32 920167782, %v159
    %v172 = vor.u32 %v170, %v171
    %v173 = vshll.u32 920167782, %v158
    %v174 = vshrl.u32 1326507024, %v159
    %v175 = vor.u32 %v173, %v174
    %vm176 = vcmp.lt.s32.totalorder %v157, 1
    %vm177 = vcmp.lt.s32.totalorder %v157, 2
    %vm178 = vcmp.lt.s32.totalorder %v157, 3
    %vm179 = vcmp.lt.s32.totalorder %v157, 4
    %v180 = vsel %vm176, %v160, %v163
    %v181 = vsel %vm179, %v169, 2102212464
    %v182 = vsel %vm178, %v166, %v181
    %v183 = vsel %vm177, %v180, %v182
    %v184 = vsel %vm176, %v163, %v166
    %v185 = vsel %vm179, %v172, 920167782
    %v186 = vsel %vm178, %v169, %v185
    %v187 = vsel %vm177, %v184, %v186
    %v188 = vsel %vm176, %v166, %v169
    %v189 = vsel %vm179, %v175, 1326507024
    %v190 = vsel %vm178, %v172, %v189
    %v191 = vsel %vm177, %v188, %v190
    %v192 = vshll.u32 %v152, 8
    %v193 = vmul.u32.u64.compose %v192, %v191
    %v194 = vextract.low.u32 %v193
    %v195 = vextract.high.u32 %v193
    %v196 = vmul.u32.u64.compose %v192, %v187
    %v197 = vextract.low.u32 %v196
    %v198 = vextract.high.u32 %v196
    %v199 = vmul.u32 %v192, %v183
    %v200 = vadd.s32 %v195, %v197
    %vm201 = vc.u32 %v195, %v197
    %v202 = vadd.s32 %v198, 1
    %v203 = vsel %vm201, %v202, %v198
    %v204 = vadd.s32 %v199, %v203
    %v205 = vadd.s32 %v204, 536870912
    %v206 = vshrl.u32 %v205, 30
    %v207 = vshll.u32 %v206, 30
    %v208 = vsub.s32 %v204, %v207
    %vm209 = vcmp.lt.s32.totalorder %v208, 0
    %v210 = vsub.s32 0, %v208
    %v211 = vsel %vm209, %v210, %v208
    %v212 = vclz %v211
    %v213 = vsub.s32 %v212, 2
    %vm214 = vcmp.gt.s32.totalorder 0, %v213
    %v215 = vsel %vm214, 0, %v213
    %v216 = vsub.s32 32, %v215
    %v217 = vshll.u32 %v208, %v215
    %v218 = vshrl.u32 %v200, %v216
    %v219 = vor.u32 %v217, %v218
    %v220 = vsub.s32 4294967266, %v215
    %v221 = vadd.s32 %v220, 127
    %v222 = vshll.u32 %v221, 23
    %v223 = vor.u32 4788187, %v222
    %v224 = vand.u32 2147483647, %v223
    %v226 = vcvt.s32.f32 %v219
    %v227 = vmul.f32 %v226, %v224
    %v228 = vxor.u32 %v227, 2147483648
    %v229 = vsel %vm146, %v228, %v227
    %v230 = vsub.s32 4, %v206
    %v231 = vsel %vm146, %v230, %v206
    %v232 = vsel %vm145, %v30, %v229
    %v233 = vsel %vm145, 0, %v231
    %v234 = vcosq.f32.pop %v232
    %v235 = vsinq.f32.pop %v232
    %vm236 = vweird.f32 %v30
    %v237 = vand.u32 %v233, 3
    %vm238 = vcmp.lt.s32.totalorder %v237, 2
    %vm239 = vcmp.eq.s32.totalorder %v237, 0
    %v240 = vxor.u32 %v235, 2147483648
    %v241 = vsel %vm239, %v234, %v240
    %vm242 = vcmp.eq.s32.totalorder %v237, 2
    %v243 = vxor.u32 %v234, 2147483648
    %v244 = vsel %vm242, %v243, %v235
    %v245 = vsel %vm238, %v241, %v244
    %v246 = vsel %vm236, nan, %v245
    %v247 = vmul.f32 %v32, %v246
    %v248 = vmul.f32 %v34, %v143
    %v249 = vsub.f32 %v247, %v248
    %v250 = vmul.f32 %v32, %v143
    %v251 = vmul.f32 %v34, %v246
    %v252 = vadd.f32 %v250, %v251
    %v253 = vmul.f32 %v34, %v36
    %v254 = vmul.f32 %v143, 9.8
    %v255 = vsub.f32 %v253, %v254
    %v256 = vsub.f32 0.0, %v32
    %v257 = vmul.f32 %v256, %v36
    %v258 = vmul.f32 %v246, 9.8
    %v259 = vsub.f32 %v257, %v258
    %v260 = vadd.f32 %v37, %v39
    %v261 = vmul.f32 %v260, 0.25
    %v262 = vadd.f32 %v259, %v261
    %v263 = vsub.f32 %v37, %v39
    %v264 = vmul.f32 %v263, 5.263158
    %v265 = vmul.f32 %v249, 0.05
    %v266 = vadd.f32 %v26, %v265
    %267 = vst [vmem:[#allocation5] sm:$0x1] %v266
    %v268 = vmul.f32 %v252, 0.05
    %v269 = vadd.f32 %v28, %v268
    %s270 = scalar_lea.vmem [#allocation5], 1
    %271 = vst [vmem:[%s270] sm:$0x1] %v269
    %v272 = vmul.f32 %v36, 0.05
    %v273 = vadd.f32 %v30, %v272
    %s274 = scalar_lea.vmem [#allocation5], 2
    %275 = vst [vmem:[%s274] sm:$0x1] %v273
    %v276 = vmul.f32 %v255, 0.05
    %v277 = vadd.f32 %v32, %v276
    %s278 = scalar_lea.vmem [#allocation5], 3
    %279 = vst [vmem:[%s278] sm:$0x1] %v277
    %v280 = vmul.f32 %v262, 0.05
    %v281 = vadd.f32 %v34, %v280
    %s282 = scalar_lea.vmem [#allocation5], 4
    %283 = vst [vmem:[%s282] sm:$0x1] %v281
    %v284 = vmul.f32 %v264, 0.05
    %v285 = vadd.f32 %v36, %v284
    %s286 = scalar_lea.vmem [#allocation5], 5
    %287 = vst [vmem:[%s286] sm:$0x1] %v285
    // Predicated region
    $region14: #{tpu_custom_call.1} parent=1 // pred_check
      _
    $region15: #{tpu_custom_call.1} parent=1 // pred_check_branch
      %289 = sbr.rel (0) target = $region17
    $region16: #{tpu_custom_call.1} parent=1 // pred_region
      %s291 = ssub.s32 96, 96
      %292 = vsyncadd [#allocation4], %s291
      %s293 = sshll.u32 [#allocation5], 4
      %s294 = int_to_ptr.vmem [resolvable:$true] %s293
      %299 = dma.vmem_to_hbm [thread:$0]  %s294, 96, %s2, [#allocation4], 16, 16, 1
    $region17: #{tpu_custom_call.1} parent=1 // pred_fallthru
      _
    // Predicated region
    $region18: #{tpu_custom_call.1} parent=1 // pred_check
      _
    $region19: #{tpu_custom_call.1} parent=1 // pred_check_branch
      %301 = sbr.rel (0) target = $region21
    $region20: #{tpu_custom_call.1} parent=1 // pred_region
      %302 = dma.done [#allocation4], 96
    $region21: #{tpu_custom_call.1} parent=1 // pred_fallthru
      _
    %303 = vsyncpa [#allocation3], 1
    %304 = vsyncpa [#allocation4], 1

</llo_original>
